<compile_context>
chip_gen: v7x
topology: tpu7x:2x2x1
jax: 0.10.0
libtpu: 0.0.40
codegen_flags: <defaults>
</compile_context>

<pallas_src>
import math

import jax
import jax.numpy as jnp
from jax import lax
from jax.experimental import pallas as pl
from jax.experimental.pallas import tpu as pltpu


# ---------------------------------------------------------------------------
# Kernels (factories close over static config: N, eps, tile sizes)
# ---------------------------------------------------------------------------
def _make_fused_kernel(inv_n, eps):
    """One batch slab per grid step: reduce + normalize with a single HBM read of x."""
    def kernel(x_ref, s_ref, o_ref):
        xf = x_ref[...].astype(jnp.float32)          # (1, R, C)
        ss = jnp.sum(xf * xf)                        # f32 scalar
        rms = jnp.sqrt(ss * inv_n)
        mult = s_ref[...] * (1.0 / (rms + eps))      # (1, 1, C), kept in f32
        o_ref[...] = (xf * mult).astype(o_ref.dtype)
    return kernel


def _make_sumsq_kernel(tile_rows, total_rows, needs_mask):
    """Pass 1: per-batch sum of squares, resident (1,1,1) accumulator over the
    reduction (row-tile) axis.  Masks the partial last tile when tR ∤ R."""
    def kernel(x_ref, ss_ref):
        @pl.when(pl.program_id(1) == 0)
        def _():
            ss_ref[...] = jnp.zeros_like(ss_ref)

        xf = x_ref[...].astype(jnp.float32)
        sq = xf * xf
        if needs_mask:
            row = lax.broadcasted_iota(jnp.int32, sq.shape, 1)
            valid = (pl.program_id(1) * tile_rows + row) < total_rows
            sq = jnp.where(valid, sq, 0.0)           # where(): robust vs garbage/NaN pad
        ss_ref[...] += jnp.sum(sq)
    return kernel


def _make_normalize_kernel(inv_n, eps):
    """Pass 2: streaming normalize with the epilogue folded in (rsqrt + scale)."""
    def kernel(ss_ref, s_ref, x_ref, o_ref):
        rms = jnp.sqrt(ss_ref[...] * inv_n)          # (1, 1, 1) f32
        mult = s_ref[...] * (1.0 / (rms + eps))      # (1, 1, C) f32
        o_ref[...] = (x_ref[...].astype(jnp.float32) * mult).astype(o_ref.dtype)
    return kernel


# ---------------------------------------------------------------------------
# Layout / tiling heuristics
# ---------------------------------------------------------------------------
def _pick_layout(S, H):
    """Choose a lane-dense 2-D view of one batch slab.

    Returns (R, C, Hp).  If Hp == H, (S, H) is folded row-major into (R, C) with
    C a multiple of lcm(H, 128) (so column c maps to hidden index c % H for every
    row).  If folding is impossible, Hp is the next multiple of 128 and the caller
    zero-pads the hidden dim to Hp (zeros contribute nothing to the reduction).
    """
    N = S * H
    if H % 128 == 0:
        return S, H, H
    L = (H * 128) // math.gcd(H, 128)                 # lcm(H, 128)
    if N % L == 0:
        C = L
        for widen in (32, 16, 8, 4, 2):
            if C * widen <= 4096 and N % (C * widen) == 0:
                C *= widen
                break
        return N // C, C, H
    Hp = ((H + 127) // 128) * 128
    return S, Hp, Hp


def _pick_tile_rows(R, C, elem_bytes):
    """Row tile for the two-pass path: ~1M elements per input tile, rows aligned to
    the dtype's sublane packing (8 f32 / 16 bf16 / 32 int8).  Never returns the
    full (possibly huge) extent when R > target; a non-dividing aligned tile is
    handled by a cdiv grid + masking instead."""
    sub = {4: 8, 2: 16, 1: 32}.get(elem_bytes, 8)
    target_elems = 1 << 20                              # ~4 MiB f32 / 2 MiB bf16
    max_rows = max(sub, target_elems // max(C, 1))
    if R <= max_rows:
        return R                                        # full extent: always legal
    t = (max_rows // sub) * sub
    tt = t
    while tt >= sub:
        if R % tt == 0:
            return tt                                   # aligned divisor: no partial tile
        tt -= sub
    return t                                            # aligned, non-dividing: masked


def _vmem_limit_bytes():
    """Generation-aware scoped-VMEM limit: ~64 MiB on 128-MiB parts (v5e/v6e),
    ~48 MiB on 64-MiB parts (v7x)."""
    cap = 64 * 1024 * 1024
    try:
        cap = int(pltpu.get_tpu_info().vmem_capacity_bytes)
    except Exception:
        pass
    return min(64 * 1024 * 1024, (3 * cap) // 4)


# ---------------------------------------------------------------------------
# Wrapper
# ---------------------------------------------------------------------------
def rmsnorm(x, scale, eps=1e-8, *, force_two_pass=False, tile_rows=None):
    """x: (B, S, H), scale: (H,) -> (B, S, H).  eps / force_two_pass / tile_rows
    must be static (they are baked into the kernel)."""
    B, S, H = x.shape
    N = S * H                                           # normalizer uses ORIGINAL count
    inv_n = 1.0 / float(N)
    eps = float(eps)
    elem = jnp.dtype(x.dtype).itemsize

    R, C, Hp = _pick_layout(S, H)

    if Hp != H:
        # Lane-dense via zero padding (padding adds 0 to the sum of squares).
        x_in = jnp.pad(x, ((0, 0), (0, 0), (0, Hp - H)))
        scale_f = jnp.pad(scale.astype(jnp.float32), (0, Hp - H))
    else:
        x_in = x
        scale_f = scale.astype(jnp.float32)

    # Row-major trailing-dims reshape (fold).
    # TODO(synk): dump HLO and confirm this reshape (and the inverse on the way out)
    # lowers to a bitcast, not a relayout copy; if it materializes, drop the fold and
    # tile the (B, S, H) layout directly.
    x3 = x_in.reshape(B, R, C)

    # Per-row scale pattern of the folded layout: column c maps to hidden c % Hp.
    scale_row = jnp.tile(scale_f, C // Hp).reshape(1, 1, C)

    vmem_limit = _vmem_limit_bytes()
    # Fused single pass needs: double-buffered in + out slabs plus ~3 f32-sized
    # elementwise temporaries inside the body.
    fused_bytes = R * C * (4 * elem + 3 * 4) + 2 * C * 4
    use_fused = (not force_two_pass) and fused_bytes <= (vmem_limit * 85) // 100

    if use_fused:
        out3 = pl.pallas_call(
            _make_fused_kernel(inv_n, eps),
            out_shape=jax.ShapeDtypeStruct((B, R, C), x.dtype),
            grid_spec=pltpu.PrefetchScalarGridSpec(
                num_scalar_prefetch=0,
                grid=(B,),
                in_specs=[pl.BlockSpec((1, R, C), lambda b: (b, 0, 0)),
                          pl.BlockSpec((1, 1, C), lambda b: (0, 0, 0))],
                out_specs=pl.BlockSpec((1, R, C), lambda b: (b, 0, 0)),
            ),
            compiler_params=pltpu.CompilerParams(
                dimension_semantics=("parallel",),
                vmem_limit_bytes=vmem_limit),
        )(x3, scale_row)
    else:
        tR = int(tile_rows) if tile_rows is not None else _pick_tile_rows(R, C, elem)
        tR = min(tR, R)
        n_t = (R + tR - 1) // tR
        needs_mask = (R % tR) != 0

        # ---- Pass 1: per-batch sum of squares (tiled reduction, axis last) -----
        ss = pl.pallas_call(
            _make_sumsq_kernel(tR, R, needs_mask),
            out_shape=jax.ShapeDtypeStruct((B, 1, 1), jnp.float32),
            grid_spec=pltpu.PrefetchScalarGridSpec(
                num_scalar_prefetch=0,
                grid=(B, n_t),
                in_specs=[pl.BlockSpec((1, tR, C), lambda b, t: (b, t, 0))],
                out_specs=pl.BlockSpec((1, 1, 1), lambda b, t: (b, 0, 0)),
            ),
            compiler_params=pltpu.CompilerParams(
                dimension_semantics=("parallel", "arbitrary"),
                vmem_limit_bytes=vmem_limit),
        )(x3)
        # TODO(synk): on v7x with B == 1, split the reduction axis into a small
        # 'parallel' prefix (partial sums added here) so both TensorCores get work.

        # ---- Pass 2: streaming normalize, epilogue folded in-kernel ------------
        out3 = pl.pallas_call(
            _make_normalize_kernel(inv_n, eps),
            out_shape=jax.ShapeDtypeStruct((B, R, C), x.dtype),
            grid_spec=pltpu.PrefetchScalarGridSpec(
                num_scalar_prefetch=0,
                grid=(B, n_t),
                in_specs=[
                    pl.BlockSpec((1, 1, 1), lambda b, t: (b, 0, 0)),   # ss[b]
                    pl.BlockSpec((1, 1, C), lambda b, t: (0, 0, 0)),   # scale row
                    pl.BlockSpec((1, tR, C), lambda b, t: (b, t, 0)),  # x tile
                ],
                out_specs=pl.BlockSpec((1, tR, C), lambda b, t: (b, t, 0)),
            ),
            compiler_params=pltpu.CompilerParams(
                dimension_semantics=("parallel", "parallel"),
                vmem_limit_bytes=vmem_limit),
        )(ss, scale_row, x3)

    out = out3.reshape(B, S, Hp)
    if Hp != H:
        out = out[:, :, :H]
    return out


# ---------------------------------------------------------------------------
# Self-test
# ---------------------------------------------------------------------------
def _reference(x, scale, eps):
    xf = x.astype(jnp.float32)
    frob = jnp.sqrt(jnp.sum(xf * xf, axis=(1, 2), keepdims=True))
    rms = frob * (x.shape[1] * x.shape[2]) ** -0.5
    out = scale.astype(jnp.float32)[None, None, :] * (xf / (rms + eps))
    return out.astype(x.dtype)


def _check(name, out, ref, tol):
    assert out.shape == ref.shape and out.dtype == ref.dtype, name
    a = jnp.asarray(out, jnp.float32)
    b = jnp.asarray(ref, jnp.float32)
    assert jnp.allclose(a, b, atol=tol, rtol=tol), f"{name}: mismatch vs reference"


def _make_scale(H, dtype=jnp.float32):
    # Module init is torch.ones(H); use a deterministic non-uniform scale here to
    # also exercise the per-channel path of the kernel.
    return (0.5 + jnp.arange(H, dtype=jnp.float32) / H).astype(dtype)


if __name__ == "__main__":
    eps = 1e-8
    k1, k2, k3, k4 = jax.random.split(jax.random.PRNGKey(0), 4)

    # 1) Canonical shapes (B=2, S=8, H=32): fused single pass, folded layout.
    x = jax.random.normal(k1, (2, 8, 32), dtype=jnp.float32)
    s = _make_scale(32)
    out = jax.block_until_ready(rmsnorm(x, s, eps=eps))
    _check("fused/fold", out, _reference(x, s, eps), 1e-5)

    # 2) Same inputs through the two-pass fallback (reduce + fused-epilogue normalize).
    out = jax.block_until_ready(rmsnorm(x, s, eps=eps, force_two_pass=True))
    _check("two-pass", out, _reference(x, s, eps), 1e-5)

    # 3) Two-pass with a non-dividing row tile (R=20, tR=8): masked reduce +
    #    clipped partial output tile.
    x = jax.random.normal(k2, (2, 20, 128), dtype=jnp.float32)
    s = _make_scale(128)
    out = jax.block_until_ready(
        rmsnorm(x, s, eps=eps, force_two_pass=True, tile_rows=8))
    _check("two-pass/masked", out, _reference(x, s, eps), 1e-5)

    # 4) Hidden dim that can neither stay nor fold lane-dense (H=48, S=7): pad path.
    x = jax.random.normal(k3, (2, 7, 48), dtype=jnp.float32)
    s = _make_scale(48)
    out = jax.block_until_ready(rmsnorm(x, s, eps=eps))
    _check("fused/padded-H", out, _reference(x, s, eps), 1e-5)

    # 5) bf16 inputs (f32 accumulation and f32 normalizer in-kernel).
    x = jax.random.normal(k4, (2, 16, 64), dtype=jnp.float32).astype(jnp.bfloat16)
    s = _make_scale(64)
    out = jax.block_until_ready(rmsnorm(x, s, eps=eps))
    _check("fused/bf16", out, _reference(x, s, eps), 2e-2)

    print("KERNEL_OK")
</pallas_src>

<mosaic_0001>
module attributes {stable_mosaic.version = 11 : i64} {
  func.func @kernel(%arg0: i32, %arg1: memref<1x1x256xf32, #tpu.memory_space<vmem>>, %arg2: memref<1x1x256xf32, #tpu.memory_space<vmem>>, %arg3: memref<1x1x256xf32, #tpu.memory_space<vmem>>) attributes {dimension_semantics = [#tpu.dimension_semantics<parallel>], iteration_bounds = array<i64: 2>, scalar_prefetch = 0 : i64, scratch_operands = 0 : i64, tpu.core_type = #tpu.core_type<tc>, window_params = [{transform_indices = @transform_0, window_bounds = array<i64: 1, 1, 256>}, {pipeline_mode = #tpu.pipeline_mode<synchronous>, transform_indices = @transform_1, window_bounds = array<i64: 1, 1, 256>}, {transform_indices = @transform_2, window_bounds = array<i64: 1, 1, 256>}]} {
    %c0 = arith.constant 0 : index
    %c0_0 = arith.constant 0 : index
    %c0_1 = arith.constant 0 : index
    %0 = vector.load %arg1[%c0, %c0_0, %c0_1] : memref<1x1x256xf32, #tpu.memory_space<vmem>>, vector<1x1x256xf32>
    %1 = arith.mulf %0, %0 : vector<1x1x256xf32>
    %2 = vector.shape_cast %1 : vector<1x1x256xf32> to vector<1x1x1x256xf32>
    %cst = arith.constant dense<0.000000e+00> : vector<1xf32>
    %3 = vector.multi_reduction <add>, %2, %cst [1, 2, 3] : vector<1x1x1x256xf32> to vector<1xf32>
    %4 = vector.shape_cast %3 : vector<1xf32> to vector<1x1x1x1xf32>
    %5 = vector.extract %4[0, 0, 0, 0] : f32 from vector<1x1x1x1xf32>
    %cst_2 = arith.constant 3.906250e-03 : f32
    %6 = arith.mulf %5, %cst_2 : f32
    %7 = math.sqrt %6 : f32
    %c0_3 = arith.constant 0 : index
    %c0_4 = arith.constant 0 : index
    %c0_5 = arith.constant 0 : index
    %8 = vector.load %arg2[%c0_3, %c0_4, %c0_5] : memref<1x1x256xf32, #tpu.memory_space<vmem>>, vector<1x1x256xf32>
    %cst_6 = arith.constant 9.99999993E-9 : f32
    %9 = arith.addf %7, %cst_6 : f32
    %cst_7 = arith.constant 1.000000e+00 : f32
    %10 = arith.divf %cst_7, %9 : f32
    %11 = vector.broadcast %10 : f32 to vector<1x1x256xf32>
    %12 = arith.mulf %8, %11 : vector<1x1x256xf32>
    %13 = arith.mulf %0, %12 : vector<1x1x256xf32>
    %c0_8 = arith.constant 0 : index
    %c0_9 = arith.constant 0 : index
    %c0_10 = arith.constant 0 : index
    %14 = vector.load %arg3[%c0_8, %c0_9, %c0_10] : memref<1x1x256xf32, #tpu.memory_space<vmem>>, vector<1x1x256xf32>
    tpu.vector_store %arg3[%c0_8, %c0_9, %c0_10], %13 {strides = array<i32>} : memref<1x1x256xf32, #tpu.memory_space<vmem>>, vector<1x1x256xf32>,
    return
  }
  func.func @transform_0(%arg0: i32) -> (i32, i32, i32) {
    %c0_i32 = arith.constant 0 : i32
    %c0_i32_0 = arith.constant 0 : i32
    %c0_i32_1 = arith.constant 0 : i32
    return %arg0, %c0_i32, %c0_i32_0 : i32, i32, i32
  }
  func.func @transform_1(%arg0: i32) -> (i32, i32, i32) {
    %c0_i32 = arith.constant 0 : i32
    %c0_i32_0 = arith.constant 0 : i32
    %c0_i32_1 = arith.constant 0 : i32
    %c0_i32_2 = arith.constant 0 : i32
    return %c0_i32, %c0_i32_0, %c0_i32_1 : i32, i32, i32
  }
  func.func @transform_2(%arg0: i32) -> (i32, i32, i32) {
    %c0_i32 = arith.constant 0 : i32
    %c0_i32_0 = arith.constant 0 : i32
    %c0_i32_1 = arith.constant 0 : i32
    return %arg0, %c0_i32, %c0_i32_0 : i32, i32, i32
  }
}

</mosaic_0001>

<llo_original>
// kernel: tpu_custom_call.1
$region0: #{tpu_custom_call.1}
  #allocation0 [shape = 'u32[]', space=smem, size = 0x4, offset = 0x4, fixed_abs, tag = 'smem constant byte address 0x4 - core index']
  #allocation1 [shape = 'u32[144,128]{1,0:T(1,128)}', space=vmem, size = 0x12000, scoped, tag = 'internal scratch']
  %s0 = inlined_call_operand.hbm [shape: f32[2,1,256], index: 0, kind: input, shape index: {}]
  %s1 = inlined_call_operand.vmem [shape: f32[1,1,256], index: 1, kind: input, shape index: {}]
  %s2 = inlined_call_operand.hbm [shape: f32[2,1,256], index: 2, kind: output, shape index: {}]
  %s3 = sld [smem:[#allocation0]]
  $region45: #{tpu_custom_call.1} parent=0
    _
  %s5 = ssub.s32 1, %s3
  %s6 = scalar_select 0, %s5, %s3
  $region1: #{tpu_custom_call.1} parent=0
    #allocation2 [shape = 'u8[2048]{0}', space=vmem, size = 0x800, scoped, tag = 'input window, operand 0']
    #allocation3 [shape = 's32[2]{0}', space=sflag, size = 0x8, scoped, tag = 'scoped memory for tpu_custom_call.1']
    #allocation4 [shape = 's32[2]{0}', space=sflag, size = 0x8, scoped, tag = 'scoped memory for tpu_custom_call.1']
    #allocation5 [shape = 'u8[2048]{0}', space=vmem, size = 0x800, scoped, tag = 'output window, operand 0']
    %7 = vsyncpa [#allocation3], 0
    %s8 = scalar_lea.sflag [#allocation3], 1
    %9 = vsyncpa %s8, 0
    %10 = vsyncpa [#allocation4], 0
    %s11 = scalar_lea.sflag [#allocation4], 1
    %12 = vsyncpa %s11, 0
    loop: start=0, step=1, limit=4
    $region2: #{tpu_custom_call.1} parent=1 // loop_pre_header
      _
    $region3: #{tpu_custom_call.1} parent=1 // loop_header
      %s14 = sphi 0, %s18
      %p15 = scmp.ge.s32.totalorder %s14, 4
      %s24 = sphi 0, %s26
      %s27 = sphi 0, %s24
      %s28 = sphi 0, %s27
      %s44 = sphi 0, %s28
      %s48 = sphi 0, %s48
      %s50 = sphi 0, %s48
      %s51 = sphi 0, %s50
      %s65 = sphi 0, %s51
      %s71 = sphi 0, %s73
      %s74 = sphi 0, %s71
      %s75 = sphi 0, %s74
      %s91 = sphi 0, %s75
    $region4: #{tpu_custom_call.1} parent=1 // loop_header_branch
      %17 = sbr.rel (%p15) target = $region8
    $region5: #{tpu_custom_call.1} parent=1 // loop_body
      %s19 = ssub.s32 %s14, 1
      %s20 = ssub.s32 %s14, 2
      %s21 = sadd.s32 %s14, 1
      %s22 = ssub.s32 %s14, %s21
      %p23 = scmp.eq.s32.totalorder %s22, 0
      %s25 = sadd.s32 %s24, 1
      %s26 = scalar_select %p23, %s24, %s25
      %p29 = pneg %p23
      %p30 = scmp.eq.s32.totalorder %s14, 1
      %p31 = por %p29, %p30
      %p32 = scmp.ne.s32.totalorder %s24, %s27
      %p33 = scmp.eq.s32.totalorder %s14, 0
      %p34 = por %p32, %p33
      %p35 = scmp.ne.s32.totalorder %s24, %s27
      %p36 = scmp.eq.s32.totalorder %s19, 1
      %p37 = por %p35, %p36
      %p38 = scmp.ne.s32.totalorder %s27, %s28
      %p39 = scmp.eq.s32.totalorder %s19, 0
      %p40 = por %p38, %p39
      %p41 = scmp.ne.s32.totalorder %s27, %s28
      %p42 = scmp.eq.s32.totalorder %s20, 1
      %p43 = por %p41, %p42
      %p45 = scmp.ne.s32.totalorder %s28, %s44
      %p46 = scmp.eq.s32.totalorder %s20, 0
      %p47 = por %p45, %p46
      %s49 = sadd.s32 %s48, 1
      %p52 = scmp.eq.s32.totalorder %s14, 1
      %p53 = scmp.ne.s32.totalorder %s48, %s50
      %p54 = scmp.eq.s32.totalorder %s14, 0
      %p55 = por %p53, %p54
      %p56 = scmp.ne.s32.totalorder %s48, %s50
      %p57 = scmp.eq.s32.totalorder %s19, 1
      %p58 = por %p56, %p57
      %p59 = scmp.ne.s32.totalorder %s50, %s51
      %p60 = scmp.eq.s32.totalorder %s19, 0
      %p61 = por %p59, %p60
      %p62 = scmp.ne.s32.totalorder %s50, %s51
      %p63 = scmp.eq.s32.totalorder %s20, 1
      %p64 = por %p62, %p63
      %p66 = scmp.ne.s32.totalorder %s51, %s65
      %p67 = scmp.eq.s32.totalorder %s20, 0
      %p68 = por %p66, %p67
      %s69 = ssub.s32 %s14, %s21
      %p70 = scmp.eq.s32.totalorder %s69, 0
      %s72 = sadd.s32 %s71, 1
      %s73 = scalar_select %p70, %s71, %s72
      %p76 = pneg %p70
      %p77 = scmp.eq.s32.totalorder %s14, 1
      %p78 = por %p76, %p77
      %p79 = scmp.ne.s32.totalorder %s71, %s74
      %p80 = scmp.eq.s32.totalorder %s14, 0
      %p81 = por %p79, %p80
      %p82 = scmp.ne.s32.totalorder %s71, %s74
      %p83 = scmp.eq.s32.totalorder %s19, 1
      %p84 = por %p82, %p83
      %p85 = scmp.ne.s32.totalorder %s74, %s75
      %p86 = scmp.eq.s32.totalorder %s19, 0
      %p87 = por %p85, %p86
      %p88 = scmp.ne.s32.totalorder %s74, %s75
      %p89 = scmp.eq.s32.totalorder %s20, 1
      %p90 = por %p88, %p89
      %p92 = scmp.ne.s32.totalorder %s75, %s91
      %p93 = scmp.eq.s32.totalorder %s20, 0
      %p94 = por %p92, %p93
      %p95 = scmp.le.s32.totalorder 1, %s14
      %p96 = scmp.lt.s32.totalorder %s14, 3
      %p97 = pnand %p95, %p96
      %p98 = pneg %p97
      // Predicated region
      $region9: #{tpu_custom_call.1} parent=5 // pred_check
        _
      $region10: #{tpu_custom_call.1} parent=5 // pred_check_branch
        %100 = sbr.rel (%p97) target = $region12
      $region11: #{tpu_custom_call.1} parent=5 // pred_region
        %s101 = ssub.s32 %s14, 1
        // Predicated region
        $region13: #{tpu_custom_call.1} parent=11 // pred_check
          %p102 = pneg %p61
        $region14: #{tpu_custom_call.1} parent=11 // pred_check_branch
          %104 = sbr.rel (%p102) target = $region16
        $region15: #{tpu_custom_call.1} parent=11 // pred_region
          _
        $region16: #{tpu_custom_call.1} parent=11 // pred_fallthru
          _
      $region12: #{tpu_custom_call.1} parent=5 // pred_fallthru
        _
      %p105 = scmp.lt.s32.totalorder %s14, 2
      // Predicated region
      $region17: #{tpu_custom_call.1} parent=5 // pred_check
        %p106 = pneg %p105
      $region18: #{tpu_custom_call.1} parent=5 // pred_check_branch
        %108 = sbr.rel (%p106) target = $region20
      $region19: #{tpu_custom_call.1} parent=5 // pred_region
        // Predicated region
        $region21: #{tpu_custom_call.1} parent=19 // pred_check
          %p109 = pneg %p34
        $region22: #{tpu_custom_call.1} parent=19 // pred_check_branch
          %111 = sbr.rel (%p109) target = $region24
        $region23: #{tpu_custom_call.1} parent=19 // pred_region
          %s112 = sand.u32 %s24, 1
          %s113 = scalar_lea.sflag [#allocation3], %s112
          %s114 = sand.u32 %s24, 1
          %s115 = smul.addr %s114, 2
          %s116 = scalar_lea.vmem [#allocation2], %s115
          %s118 = ssub.s32 32, 32
          %119 = vsyncadd %s113, %s118
          %s120 = smul.addr %s14, 2
          %s121 = smul.addr %s120, 16
          %s122 = scalar_lea.hbm %s0, %s121
          %s124 = sshll.u32 %s116, 4
          %s125 = int_to_ptr.vmem [resolvable:$true] %s124
          %127 = dma.hbm_to_vmem [thread:$0]  %s122, 32, %s125, %s113
        $region24: #{tpu_custom_call.1} parent=19 // pred_fallthru
          _
      $region20: #{tpu_custom_call.1} parent=5 // pred_fallthru
        _
      %p128 = scmp.le.s32.totalorder 1, %s14
      %p129 = scmp.lt.s32.totalorder %s14, 3
      %p130 = pnand %p128, %p129
      %p131 = pneg %p130
      // Predicated region
      $region25: #{tpu_custom_call.1} parent=5 // pred_check
        _
      $region26: #{tpu_custom_call.1} parent=5 // pred_check_branch
        %133 = sbr.rel (%p130) target = $region28
      $region27: #{tpu_custom_call.1} parent=5 // pred_region
        %s134 = ssub.s32 %s14, 1
        %s135 = sand.u32 %s27, 1
        %s136 = scalar_lea.sflag [#allocation3], %s135
        %s137 = sand.u32 %s27, 1
        %s138 = smul.addr %s137, 2
        %s139 = scalar_lea.vmem [#allocation2], %s138
        // Predicated region
        $region29: #{tpu_custom_call.1} parent=27 // pred_check
          %p140 = pneg %p40
        $region30: #{tpu_custom_call.1} parent=27 // pred_check_branch
          %142 = sbr.rel (%p140) target = $region32
        $region31: #{tpu_custom_call.1} parent=27 // pred_region
          %143 = dma.done %s136, 32
        $region32: #{tpu_custom_call.1} parent=27 // pred_fallthru
          _
        %s144 = sand.u32 %s27, 1
        %s145 = scalar_lea.sflag [#allocation3], %s144
        %s146 = sand.u32 %s27, 1
        %s147 = smul.addr %s146, 2
        %s148 = scalar_lea.vmem [#allocation2], %s147
        %p149 = pneg %p40
        %p150 = pneg %p37
        %p151 = pneg %p61
        %p152 = pneg %p58
        %p153 = pneg %p87
        %p154 = pneg %p84
        %s155 = sand.u32 %s74, 1
        %s156 = scalar_lea.sflag [#allocation4], %s155
        %s157 = sand.u32 %s74, 1
        %s158 = smul.addr %s157, 2
        %s159 = scalar_lea.vmem [#allocation5], %s158
        %v160 = vld [vmem:[%s139] sm:$0x3]
        %v161 = vmul.f32 %v160, %v160
        %v163 = vlaneseq
        %v164 = vshrl.u32 %v163, 7
        %v165 = vsub.s32 0, %v164
        %v166 = vrot.slane %v161, %v165
        %v167 = vlaneseq
        %v168 = vshrl.u32 %v167, 7
        %v169 = vsub.s32 1, %v168
        %v170 = vrot.slane %v161, %v169
        %vm173 = vcmask 1040384
        %v174 = vsel %vm173, %v166, 0.0
        %v175 = vsel %vm173, %v170, 0.0
        %v176 = vadd.f32 %v174, %v175
        %177 = vadd.xlane.f32.xlu0 %v176
        %v178 = vpop.xlane.xlu0 %177
        %v179 = vrot.slane %v178, 4
        %v180 = vadd.f32 %v178, %v179
        %v181 = vrot.slane %v180, 2
        %v182 = vadd.f32 %v180, %v181
        %v183 = vrot.slane %v182, 1
        %v184 = vadd.f32 %v182, %v183
        %s185 = vtos %v184
        %s186 = smul.f32 %s185, 0.00390625
        %v187 = vstv %s186
        %v188 = vrsqrt.pop %v187
        %v189 = vmul.f32 %v187, %v188
        %vm190 = vcmp.eq.f32.partialorder %v187, inf
        %v191 = vsel %vm190, %v187, %v189
        %vm192 = vcmp.eq.f32.partialorder %v187, 0.0
        %v193 = vand.u32 %v187, 2147483648
        %v194 = vsel %vm192, %v193, %v191
        %s195 = vtos %v194
        %v196 = vld [vmem:[%s1] sm:$0x3]
        %s197 = sadd.f32 %s195, 1e-08
        %v198 = vstv %s197
        %v199 = vrcp.pop %v198
        %s200 = vtos %v199
        %v201 = vstv %s200
        %v202 = vmul.f32 %v196, %v201
        %v203 = vmul.f32 %v160, %v202
        %v204 = vlaneseq
        %vm205 = vcmp.ge.s32.totalorder %v204, 0
        %vm206 = vcmp.lt.s32.totalorder %v204, 256
        %vm207 = vmand %vm205, %vm206
        %208 = vst.msk [vmem:[%s159] sm:$0x3] %vm207, %v203
        %s209 = sand.u32 %s74, 1
        %s210 = scalar_lea.sflag [#allocation4], %s209
        %s211 = sand.u32 %s74, 1
        %s212 = smul.addr %s211, 2
        %s213 = scalar_lea.vmem [#allocation5], %s212
        // Predicated region
        $region33: #{tpu_custom_call.1} parent=27 // pred_check
          %p214 = pneg %p84
        $region34: #{tpu_custom_call.1} parent=27 // pred_check_branch
          %216 = sbr.rel (%p214) target = $region36
        $region35: #{tpu_custom_call.1} parent=27 // pred_region
          %s218 = ssub.s32 32, 32
          %219 = vsyncadd %s210, %s218
          %s220 = smul.addr %s19, 2
          %s221 = smul.addr %s220, 16
          %s222 = scalar_lea.hbm %s2, %s221
          %s224 = sshll.u32 %s213, 4
          %s225 = int_to_ptr.vmem [resolvable:$true] %s224
          %227 = dma.vmem_to_hbm [thread:$0]  %s225, 32, %s222, %s210
        $region36: #{tpu_custom_call.1} parent=27 // pred_fallthru
          _
      $region28: #{tpu_custom_call.1} parent=5 // pred_fallthru
        _
      %p228 = scmp.le.s32.totalorder 2, %s14
      // Predicated region
      $region37: #{tpu_custom_call.1} parent=5 // pred_check
        %p229 = pneg %p228
      $region38: #{tpu_custom_call.1} parent=5 // pred_check_branch
        %231 = sbr.rel (%p229) target = $region40
      $region39: #{tpu_custom_call.1} parent=5 // pred_region
        %s232 = ssub.s32 %s14, 2
        // Predicated region
        $region41: #{tpu_custom_call.1} parent=39 // pred_check
          %p233 = pneg %p90
        $region42: #{tpu_custom_call.1} parent=39 // pred_check_branch
          %235 = sbr.rel (%p233) target = $region44
        $region43: #{tpu_custom_call.1} parent=39 // pred_region
          %s236 = sand.u32 %s75, 1
          %s237 = scalar_lea.sflag [#allocation4], %s236
          %s238 = sand.u32 %s75, 1
          %s239 = smul.addr %s238, 2
          %s240 = scalar_lea.vmem [#allocation5], %s239
          %241 = dma.done %s237, 32
        $region44: #{tpu_custom_call.1} parent=39 // pred_fallthru
          _
      $region40: #{tpu_custom_call.1} parent=5 // pred_fallthru
        _
    $region6: #{tpu_custom_call.1} parent=1 // loop_footer
      %s18 = sadd.s32 1, %s14
    $region7: #{tpu_custom_call.1} parent=1 // loop_footer_branch
      %13 = sbr.rel target = $region3
    $region8: #{tpu_custom_call.1} parent=1 // loop_exit
      _
    %242 = vsyncpa [#allocation3], 1
    %s243 = scalar_lea.sflag [#allocation3], 1
    %244 = vsyncpa %s243, 1
    %245 = vsyncpa [#allocation4], 1
    %s246 = scalar_lea.sflag [#allocation4], 1
    %247 = vsyncpa %s246, 1

</llo_original>
